<compile_context>
chip_gen: v7x
topology: tpu7x:2x2x1
jax: 0.10.0
libtpu: 0.0.40
codegen_flags: <defaults>
</compile_context>

<pallas_src>
import functools

import jax
import jax.numpy as jnp
from jax import lax
from jax.experimental import pallas as pl
from jax.experimental.pallas import tpu as pltpu


def _vq_kernel(x_ref, w_ref, hw2_ref, q_ref, stats_ref, *,
               chunk, valid_hw, mask_pad, distance_in_bf16):
    """One (batch, spatial-tile) grid step.

    x_ref:     (D, T)  channel-first input tile
    w_ref:     (K, D)  codebook (resident; constant index_map)
    hw2_ref:   (K, 1)  0.5 * ||w||^2, f32 (precomputed in the wrapper)
    q_ref:     (D, T)  quantized output tile
    stats_ref: (2, K)  row 0 = per-code counts, row 1 = broadcast sq-error
    """
    D, T = x_ref.shape
    K = w_ref.shape[0]
    n_chunks = T // chunk

    w = w_ref[...]                                           # (K, D)
    half_w2 = hw2_ref[...]                                   # (K, 1) f32
    w_dist = w.astype(jnp.bfloat16) if distance_in_bf16 else w

    # Loop-invariant constants hoisted (JAX does not CSE broadcast_in_dim).
    row = lax.broadcasted_iota(jnp.int32, (K, chunk), 0)     # (K, C)
    ones_row = jnp.ones((1, chunk), w.dtype)                 # (1, C)
    lane = (lax.broadcasted_iota(jnp.int32, (1, chunk), 1)
            if mask_pad else None)
    j = pl.program_id(1)

    def body(c, carry):
        sqerr_acc, counts_acc = carry
        off = pl.multiple_of(c * chunk, 128)
        x = x_ref[:, pl.ds(off, chunk)]                      # (D, C)
        x_dist = x.astype(jnp.bfloat16) if distance_in_bf16 else x

        # distances' = 0.5*||w||^2 - w.x   (argmin-equivalent to full L2;
        # the ||x||^2 term is constant per column and dropped)
        xw = lax.dot_general(w_dist, x_dist, (((1,), (0,)), ((), ())),
                             preferred_element_type=jnp.float32)   # (K, C) MXU
        dists = half_w2 - xw

        # argmin over the codebook axis (first index on ties)
        min_d = jnp.min(dists, axis=0, keepdims=True)              # (1, C)
        idx = jnp.min(jnp.where(dists <= min_d, row, K),
                      axis=0, keepdims=True)                       # (1, C)

        hot = row == idx                                           # (K, C) bool
        if mask_pad:
            col = j * T + off + lane
            hot = jnp.logical_and(hot, col < valid_hw)
        one_hot = hot.astype(w.dtype)                              # single cast

        # codebook gather on the MXU: (D, C) = w^T @ one_hot
        quant = lax.dot_general(w, one_hot, (((0,), (0,)), ((), ())),
                                preferred_element_type=jnp.float32)
        q_ref[:, pl.ds(off, chunk)] = quant.astype(q_ref.dtype)

        # per-code counts on the MXU as a lane-dense (1, K) row
        cnt = lax.dot_general(ones_row, one_hot, (((1,), (1,)), ((), ())),
                              preferred_element_type=jnp.float32)  # (1, K)

        diff = quant - x.astype(jnp.float32)
        sq = jnp.sum(diff * diff).reshape(1, 1)
        return sqerr_acc + sq, counts_acc + cnt

    sqerr, counts = lax.fori_loop(
        0, n_chunks, body,
        (jnp.zeros((1, 1), jnp.float32), jnp.zeros((1, K), jnp.float32)),
        unroll=True)

    stats_ref[0:1, :] = counts
    stats_ref[1:2, :] = jnp.broadcast_to(sqerr, (1, K))


def _pick_tile_hw(hw_padded, target, min_tiles=1):
    """Largest lane-aligned tile dividing hw_padded, <= target, giving >= min_tiles."""
    m = hw_padded // 128
    c_max = max(1, min(target, hw_padded) // 128)
    for want_min in (min_tiles, 1):
        for c in range(min(c_max, m), 0, -1):
            if m % c == 0 and m // c >= want_min:
                return 128 * c
    return hw_padded


def _epilogue_chunk(t):
    """Sub-chunk width (<=512, divides t) to bound (K,T) vreg live ranges."""
    if t <= 512:
        return t
    m = t // 128
    for c in (4, 3, 2):
        if m % c == 0:
            return 128 * c
    return 128


def vector_quantizer_forward(inputs_nchw, codebook, commitment_cost=0.25,
                             tile_hw=1024, distance_in_bf16=False):
    """Pallas VQ forward. Returns (output_quantized NCHW, loss, perplexity)."""
    B, D, H, W = inputs_nchw.shape
    K, D2 = codebook.shape
    assert D == D2
    HW = H * W
    N = B * HW

    # Pad the spatial axis to a lane multiple -> lane-dense stores and tiling.
    HW_p = ((HW + 127) // 128) * 128
    x = inputs_nchw.reshape(B, D, HW)
    if HW_p != HW:
        x = jnp.pad(x, ((0, 0), (0, 0), (0, HW_p - HW)))

    min_tiles = 2 if B == 1 else 1          # keep both v7x TensorCores busy
    T = _pick_tile_hw(HW_p, tile_hw, min_tiles)
    n_j = HW_p // T
    chunk = _epilogue_chunk(T)

    # Hoisted codebook norm: 0.5*||w||^2 as a tiny resident (K, 1) f32 input.
    half_w2 = 0.5 * jnp.sum(codebook.astype(jnp.float32) ** 2, axis=1,
                            keepdims=True)

    kernel = functools.partial(_vq_kernel, chunk=chunk, valid_hw=HW,
                               mask_pad=(HW_p != HW),
                               distance_in_bf16=distance_in_bf16)

    cost = pl.CostEstimate(
        flops=int(4 * B * HW_p * K * D),
        transcendentals=0,
        bytes_accessed=int(2 * x.size * x.dtype.itemsize
                           + codebook.size * codebook.dtype.itemsize
                           + K * 4 + B * n_j * 2 * K * 4),
    )

    q, stats = pl.pallas_call(
        kernel,
        out_shape=(
            jax.ShapeDtypeStruct((B, D, HW_p), inputs_nchw.dtype),
            jax.ShapeDtypeStruct((B, n_j, 2, K), jnp.float32),
        ),
        grid=(B, n_j),
        in_specs=[
            pl.BlockSpec((None, D, T), lambda b, j: (b, 0, j)),   # x tile
            pl.BlockSpec((K, D), lambda b, j: (0, 0)),            # codebook
            pl.BlockSpec((K, 1), lambda b, j: (0, 0)),            # 0.5*||w||^2
        ],
        out_specs=(
            pl.BlockSpec((None, D, T), lambda b, j: (b, 0, j)),
            pl.BlockSpec((None, None, 2, K), lambda b, j: (b, j, 0, 0)),
        ),
        compiler_params=pltpu.CompilerParams(
            dimension_semantics=("parallel", "parallel"),
            vmem_limit_bytes=28 * 1024 * 1024),
        cost_estimate=cost,
    )(x, codebook, half_w2)

    quantized = q[:, :, :HW].reshape(B, D, H, W)

    # loss = q_latent_loss + commitment_cost * e_latent_loss
    #      = (1 + commitment_cost) * MSE(quantized, inputs)   (forward value)
    total_sq = jnp.sum(stats[:, :, 1, 0])
    mse = total_sq / jnp.float32(N * D)
    loss = (1.0 + commitment_cost) * mse

    # perplexity from codebook usage accumulated over ALL (unpadded) pixels
    counts = jnp.sum(stats[:, :, 0, :], axis=(0, 1))               # (K,)
    avg_probs = counts / jnp.float32(N)
    perplexity = jnp.exp(-jnp.sum(avg_probs * jnp.log(avg_probs + 1e-10)))

    # Forward value of inputs + (quantized - inputs).detach() is exactly `quantized`.
    # TODO(synk): straight-through gradient (.detach()) is a training-time autodiff
    # concern; only the forward values are reproduced here.
    return quantized, loss, perplexity


def _reference_forward(inputs_nchw, codebook, commitment_cost=0.25):
    """Pure-JAX reference mirroring the PyTorch forward (for correctness check)."""
    B, D, H, W = inputs_nchw.shape
    K = codebook.shape[0]
    d = jnp.sum(
        (inputs_nchw[:, None, :, :, :]
         - codebook.reshape(1, K, D, 1, 1)) ** 2, axis=2)          # (B, K, H, W)
    idx = jnp.argmin(d, axis=1)                                    # (B, H, W)
    quant = jnp.transpose(codebook[idx], (0, 3, 1, 2))             # (B, D, H, W)
    mse = jnp.mean((quant - inputs_nchw) ** 2)
    loss = (1.0 + commitment_cost) * mse
    one_hot = jax.nn.one_hot(idx.reshape(-1), K, dtype=jnp.float32)
    avg_probs = jnp.mean(one_hot, axis=0)
    perp = jnp.exp(-jnp.sum(avg_probs * jnp.log(avg_probs + 1e-10)))
    return quant, loss, perp


def _check(name, out_q, loss, perp, inputs, codebook):
    ref_q, ref_loss, ref_perp = _reference_forward(inputs, codebook)
    assert out_q.shape == inputs.shape, name + ": shape"
    # Tie-tolerant check: the selected code's true distance must equal the
    # reference optimum; near-ties may legally resolve to either code.
    d_k = jnp.sum((out_q - inputs) ** 2, axis=1)
    d_r = jnp.sum((ref_q - inputs) ** 2, axis=1)
    assert float(jnp.max(jnp.abs(d_k - d_r))) < 1e-2, name + ": distance mismatch"
    mismatch = float(jnp.mean(jnp.any(jnp.abs(out_q - ref_q) > 1e-4, axis=1)))
    assert mismatch < 0.01, name + ": too many index mismatches"
    assert jnp.allclose(loss, ref_loss, rtol=1e-3, atol=1e-4), name + ": loss"
    assert jnp.allclose(perp, ref_perp, rtol=1e-3, atol=1e-3), name + ": perplexity"


if __name__ == "__main__":
    embedding_dim = 128     # module default
    num_embeddings = 128    # module default

    key = jax.random.PRNGKey(0)
    k_w, k1, k2, k3 = jax.random.split(key, 4)
    # nn.Embedding default init ~ N(0, 1); deterministic synthetic codebook.
    codebook = jax.random.normal(k_w, (num_embeddings, embedding_dim),
                                 dtype=jnp.float32)

    # Case A: multi-tile spatial grid (B=2, HW=256, T=128 -> grid (2, 2)).
    xa = jax.random.normal(k1, (2, embedding_dim, 16, 16), dtype=jnp.float32)
    qa, la, pa = vector_quantizer_forward(xa, codebook, tile_hw=128)
    jax.block_until_ready((qa, la, pa))
    _check("caseA", qa, la, pa, xa, codebook)

    # Case B: non-lane-aligned spatial size (HW=100 -> padded to 128, masked),
    # B=1 so the tile picker tries to keep >=2 tiles for dual-TC sharding.
    xb = jax.random.normal(k2, (1, embedding_dim, 10, 10), dtype=jnp.float32)
    qb, lb, pb = vector_quantizer_forward(xb, codebook)
    jax.block_until_ready((qb, lb, pb))
    _check("caseB", qb, lb, pb, xb, codebook)

    # Case C: large tile (T=1024) exercising the sub-chunked epilogue path.
    xc = jax.random.normal(k3, (2, embedding_dim, 32, 32), dtype=jnp.float32)
    qc, lc, pc = vector_quantizer_forward(xc, codebook, tile_hw=1024)
    jax.block_until_ready((qc, lc, pc))
    _check("caseC", qc, lc, pc, xc, codebook)

    print("KERNEL_OK")
</pallas_src>

<mosaic_0001>
module attributes {stable_mosaic.version = 11 : i64} {
  func.func @_vq_kernel(%arg0: i32, %arg1: i32, %arg2: memref<1x128x128xf32, #tpu.memory_space<vmem>>, %arg3: memref<128x128xf32, #tpu.memory_space<vmem>>, %arg4: memref<128x1xf32, #tpu.memory_space<vmem>>, %arg5: memref<1x128x128xf32, #tpu.memory_space<vmem>>, %arg6: memref<1x1x2x128xf32, #tpu.memory_space<vmem>>) attributes {dimension_semantics = [#tpu.dimension_semantics<parallel>, #tpu.dimension_semantics<parallel>], iteration_bounds = array<i64: 2, 2>, scalar_prefetch = 0 : i64, scratch_operands = 0 : i64, tpu.core_type = #tpu.core_type<tc>, window_params = [{transform_indices = @transform_0, window_bounds = array<i64: 1, 128, 128>}, {pipeline_mode = #tpu.pipeline_mode<synchronous>, transform_indices = @transform_1, window_bounds = array<i64: 128, 128>}, {pipeline_mode = #tpu.pipeline_mode<synchronous>, transform_indices = @transform_2, window_bounds = array<i64: 128, 1>}, {transform_indices = @transform_3, window_bounds = array<i64: 1, 128, 128>}, {transform_indices = @transform_4, window_bounds = array<i64: 1, 1, 2, 128>}]} {
    %c0 = arith.constant 0 : index
    %c0_0 = arith.constant 0 : index
    %0 = vector.load %arg3[%c0, %c0_0] : memref<128x128xf32, #tpu.memory_space<vmem>>, vector<128x128xf32>
    %c0_1 = arith.constant 0 : index
    %c0_2 = arith.constant 0 : index
    %1 = vector.load %arg4[%c0_1, %c0_2] : memref<128x1xf32, #tpu.memory_space<vmem>>, vector<128x1xf32>
    %2 = tpu.iota {dimensions = array<i32: 0>} : vector<128x128xi32>
    %cst = arith.constant 1.000000e+00 : f32
    %3 = vector.broadcast %cst : f32 to vector<1x128xf32>
    %cst_3 = arith.constant 0.000000e+00 : f32
    %4 = vector.broadcast %cst_3 : f32 to vector<1x1xf32>
    %cst_4 = arith.constant 0.000000e+00 : f32
    %5 = vector.broadcast %cst_4 : f32 to vector<1x128xf32>
    %c0_i32 = arith.constant 0 : i32
    %c128_i32 = arith.constant 128 : i32
    %6 = arith.muli %c0_i32, %c128_i32 : i32
    %7 = tpu.assume_multiple %6, 128 : i32
    %c0_5 = arith.constant 0 : index
    %c0_6 = arith.constant 0 : index
    %8 = arith.index_cast %7 : i32 to index
    %9 = vector.load %arg2[%c0_5, %c0_6, %8] : memref<1x128x128xf32, #tpu.memory_space<vmem>>, vector<1x128x128xf32>
    %10 = vector.shape_cast %9 : vector<1x128x128xf32> to vector<128x128xf32>
    %cst_7 = arith.constant dense<0.000000e+00> : vector<128x128xf32>
    %11 = tpu.matmul %0, %10, %cst_7 {dimension_numbers = #tpu.dot_dimension_numbers<[1], [0], [0], [1], [0, 0, 1, 1], [], []>} : vector<128x128xf32>, vector<128x128xf32>, vector<128x128xf32> -> vector<128x128xf32>
    %12 = vector.broadcast %1 : vector<128x1xf32> to vector<128x128xf32>
    %13 = arith.subf %12, %11 : vector<128x128xf32>
    %cst_8 = arith.constant dense<0x7F800000> : vector<128xf32>
    %14 = vector.multi_reduction <minimumf>, %13, %cst_8 [0] : vector<128x128xf32> to vector<128xf32>
    %15 = vector.shape_cast %14 : vector<128xf32> to vector<1x128xf32>
    %16 = vector.broadcast %15 : vector<1x128xf32> to vector<128x128xf32>
    %17 = arith.cmpf ole, %13, %16 : vector<128x128xf32>
    %c128_i32_9 = arith.constant 128 : i32
    %18 = vector.broadcast %c128_i32_9 : i32 to vector<128x128xi32>
    %19 = arith.select %17, %2, %18 : vector<128x128xi1>, vector<128x128xi32>
    %cst_10 = arith.constant dense<2147483647> : vector<128xi32>
    %20 = vector.multi_reduction <minsi>, %19, %cst_10 [0] : vector<128x128xi32> to vector<128xi32>
    %21 = vector.shape_cast %20 : vector<128xi32> to vector<1x128xi32>
    %22 = vector.broadcast %21 : vector<1x128xi32> to vector<128x128xi32>
    %23 = arith.cmpi eq, %2, %22 : vector<128x128xi32>
    %24 = arith.extui %23 : vector<128x128xi1> to vector<128x128xi32>
    %25 = arith.sitofp %24 : vector<128x128xi32> to vector<128x128xf32>
    %cst_11 = arith.constant dense<0.000000e+00> : vector<128x128xf32>
    %26 = tpu.matmul %0, %25, %cst_11 {dimension_numbers = #tpu.dot_dimension_numbers<[0], [0], [1], [1], [0, 1, 1, 1], [], []>} : vector<128x128xf32>, vector<128x128xf32>, vector<128x128xf32> -> vector<128x128xf32>
    %c0_12 = arith.constant 0 : index
    %c0_13 = arith.constant 0 : index
    %27 = arith.index_cast %7 : i32 to index
    %28 = vector.load %arg5[%c0_12, %c0_13, %27] : memref<1x128x128xf32, #tpu.memory_space<vmem>>, vector<1x128x128xf32>
    %29 = vector.shape_cast %28 : vector<1x128x128xf32> to vector<128x128xf32>
    %30 = vector.shape_cast %26 : vector<128x128xf32> to vector<1x128x128xf32>
    tpu.vector_store %arg5[%c0_12, %c0_13, %27], %30 {strides = array<i32>} : memref<1x128x128xf32, #tpu.memory_space<vmem>>, vector<1x128x128xf32>,
    %cst_14 = arith.constant dense<0.000000e+00> : vector<1x128xf32>
    %31 = tpu.matmul %3, %25, %cst_14 {dimension_numbers = #tpu.dot_dimension_numbers<[1], [1], [0], [0], [0, 0, 1, 0], [], []>} : vector<1x128xf32>, vector<128x128xf32>, vector<1x128xf32> -> vector<1x128xf32>
    %32 = arith.subf %26, %10 : vector<128x128xf32>
    %33 = arith.mulf %32, %32 : vector<128x128xf32>
    %34 = vector.shape_cast %33 : vector<128x128xf32> to vector<1x128x128xf32>
    %cst_15 = arith.constant dense<0.000000e+00> : vector<1xf32>
    %35 = vector.multi_reduction <add>, %34, %cst_15 [1, 2] : vector<1x128x128xf32> to vector<1xf32>
    %36 = vector.shape_cast %35 : vector<1xf32> to vector<1x1x1xf32>
    %37 = vector.extract %36[0, 0, 0] : f32 from vector<1x1x1xf32>
    %38 = vector.broadcast %37 : f32 to vector<1x1xf32>
    %39 = arith.addf %4, %38 : vector<1x1xf32>
    %40 = arith.addf %5, %31 : vector<1x128xf32>
    %c1_i32 = arith.constant 1 : i32
    %c0_16 = arith.constant 0 : index
    %c0_17 = arith.constant 0 : index
    %c0_18 = arith.constant 0 : index
    %c0_19 = arith.constant 0 : index
    %41 = vector.load %arg6[%c0_16, %c0_17, %c0_18, %c0_19] : memref<1x1x2x128xf32, #tpu.memory_space<vmem>>, vector<1x1x1x128xf32>
    %42 = vector.shape_cast %41 : vector<1x1x1x128xf32> to vector<1x128xf32>
    %43 = vector.shape_cast %40 : vector<1x128xf32> to vector<1x1x1x128xf32>
    tpu.vector_store %arg6[%c0_16, %c0_17, %c0_18, %c0_19], %43 {strides = array<i32>} : memref<1x1x2x128xf32, #tpu.memory_space<vmem>>, vector<1x1x1x128xf32>,
    %44 = vector.shape_cast %39 : vector<1x1xf32> to vector<1x1xf32>
    %45 = vector.broadcast %44 : vector<1x1xf32> to vector<1x128xf32>
    %c0_20 = arith.constant 0 : index
    %c0_21 = arith.constant 0 : index
    %c1 = arith.constant 1 : index
    %c0_22 = arith.constant 0 : index
    %46 = vector.load %arg6[%c0_20, %c0_21, %c1, %c0_22] : memref<1x1x2x128xf32, #tpu.memory_space<vmem>>, vector<1x1x1x128xf32>
    %47 = vector.shape_cast %46 : vector<1x1x1x128xf32> to vector<1x128xf32>
    %48 = vector.shape_cast %45 : vector<1x128xf32> to vector<1x1x1x128xf32>
    tpu.vector_store %arg6[%c0_20, %c0_21, %c1, %c0_22], %48 {strides = array<i32>} : memref<1x1x2x128xf32, #tpu.memory_space<vmem>>, vector<1x1x1x128xf32>,
    return
  }
  func.func @transform_0(%arg0: i32, %arg1: i32) -> (i32, i32, i32) {
    %c0_i32 = arith.constant 0 : i32
    %c0_i32_0 = arith.constant 0 : i32
    return %arg0, %c0_i32, %arg1 : i32, i32, i32
  }
  func.func @transform_1(%arg0: i32, %arg1: i32) -> (i32, i32) {
    %c0_i32 = arith.constant 0 : i32
    %c0_i32_0 = arith.constant 0 : i32
    %c0_i32_1 = arith.constant 0 : i32
    return %c0_i32, %c0_i32_0 : i32, i32
  }
  func.func @transform_2(%arg0: i32, %arg1: i32) -> (i32, i32) {
    %c0_i32 = arith.constant 0 : i32
    %c0_i32_0 = arith.constant 0 : i32
    %c0_i32_1 = arith.constant 0 : i32
    return %c0_i32, %c0_i32_0 : i32, i32
  }
  func.func @transform_3(%arg0: i32, %arg1: i32) -> (i32, i32, i32) {
    %c0_i32 = arith.constant 0 : i32
    %c0_i32_0 = arith.constant 0 : i32
    return %arg0, %c0_i32, %arg1 : i32, i32, i32
  }
  func.func @transform_4(%arg0: i32, %arg1: i32) -> (i32, i32, i32, i32) {
    %c0_i32 = arith.constant 0 : i32
    %c0_i32_0 = arith.constant 0 : i32
    %c0_i32_1 = arith.constant 0 : i32
    return %arg0, %arg1, %c0_i32, %c0_i32_0 : i32, i32, i32, i32
  }
}

</mosaic_0001>

<llo_original>
// kernel: tpu_custom_call.1
$region0: #{tpu_custom_call.1}
  #allocation0 [shape = 'u32[]', space=smem, size = 0x4, offset = 0x4, fixed_abs, tag = 'smem constant byte address 0x4 - core index']
  #allocation1 [shape = 'u32[144,128]{1,0:T(1,128)}', space=vmem, size = 0x12000, scoped, tag = 'internal scratch']
  %s0 = inlined_call_operand.hbm [shape: f32[2,128,256], index: 0, kind: input, shape index: {}]
  %s1 = inlined_call_operand.vmem [shape: f32[128,128], index: 1, kind: input, shape index: {}]
  %s2 = inlined_call_operand.vmem [shape: f32[128,1], index: 2, kind: input, shape index: {}]
  %s3 = inlined_call_operand.hbm [shape: f32[2,128,256], index: 3, kind: output, shape index: {0}]
  %s4 = inlined_call_operand.hbm [shape: f32[2,2,2,128], index: 4, kind: output, shape index: {1}]
  %5 = xla_tuple %s3, %s4
  %s6 = sld [smem:[#allocation0]]
  $region57: #{tpu_custom_call.1} parent=0
    _
  %s8 = ssub.s32 1, %s6
  %s9 = scalar_select 0, %s8, %s6
  $region1: #{tpu_custom_call.1} parent=0
    #allocation2 [shape = 'u8[131072]{0}', space=vmem, size = 0x20000, scoped, tag = 'input window, operand 0']
    #allocation3 [shape = 's32[2]{0}', space=sflag, size = 0x8, scoped, tag = 'scoped memory for tpu_custom_call.1']
    #allocation4 [shape = 's32[2]{0}', space=sflag, size = 0x8, scoped, tag = 'scoped memory for tpu_custom_call.1']
    #allocation5 [shape = 'u8[131072]{0}', space=vmem, size = 0x20000, scoped, tag = 'output window, operand 0']
    #allocation6 [shape = 'u8[2048]{0}', space=vmem, size = 0x800, scoped, tag = 'output window, operand 1']
    #allocation7 [shape = 's32[2]{0}', space=sflag, size = 0x8, scoped, tag = 'scoped memory for tpu_custom_call.1']
    %10 = vsyncpa [#allocation3], 0
    %s11 = scalar_lea.sflag [#allocation3], 1
    %12 = vsyncpa %s11, 0
    %13 = vsyncpa [#allocation4], 0
    %s14 = scalar_lea.sflag [#allocation4], 1
    %15 = vsyncpa %s14, 0
    %16 = vsyncpa [#allocation7], 0
    %s17 = scalar_lea.sflag [#allocation7], 1
    %18 = vsyncpa %s17, 0
    loop: start=0, step=1, limit=6
    $region2: #{tpu_custom_call.1} parent=1 // loop_pre_header
      _
    $region3: #{tpu_custom_call.1} parent=1 // loop_header
      %s20 = sphi 0, %s24
      %p21 = scmp.ge.s32.totalorder %s20, 6
      %s27 = sphi 0, %s39
      %s28 = sphi 0, %s35
      %s29 = sphi 0, %s27
      %s30 = sphi 0, %s28
      %s31 = sphi 0, %s29
      %s32 = sphi 0, %s30
      %s44 = sphi 0, %s46
      %s47 = sphi 0, %s44
      %s48 = sphi 0, %s47
      %s64 = sphi 0, %s48
      %s68 = sphi 0, %s68
      %s70 = sphi 0, %s68
      %s71 = sphi 0, %s70
      %s85 = sphi 0, %s71
      %s89 = sphi 0, %s89
      %s91 = sphi 0, %s89
      %s92 = sphi 0, %s91
      %s106 = sphi 0, %s92
      %s114 = sphi 0, %s116
      %s117 = sphi 0, %s114
      %s118 = sphi 0, %s117
      %s134 = sphi 0, %s118
      %s142 = sphi 0, %s144
      %s145 = sphi 0, %s142
      %s146 = sphi 0, %s145
      %s162 = sphi 0, %s146
    $region4: #{tpu_custom_call.1} parent=1 // loop_header_branch
      %23 = sbr.rel (%p21) target = $region8
    $region5: #{tpu_custom_call.1} parent=1 // loop_body
      %s25 = ssub.s32 %s20, 1
      %s26 = ssub.s32 %s20, 2
      %s33 = sadd.s32 1, %s28
      %p34 = scmp.ge.s32.totalorder %s33, 2
      %s35 = scalar_select %p34, 0, %s33
      %s36 = sadd.s32 1, %s27
      %s37 = scalar_select %p34, %s36, %s27
      %p38 = scmp.ge.s32.totalorder %s37, 2
      %s39 = scalar_select %p38, 0, %s37
      %s40 = ssub.s32 %s27, %s39
      %s41 = ssub.s32 %s28, %s35
      %s42 = sor.u32 %s40, %s41
      %p43 = scmp.eq.s32.totalorder %s42, 0
      %s45 = sadd.s32 %s44, 1
      %s46 = scalar_select %p43, %s44, %s45
      %p49 = pneg %p43
      %p50 = scmp.eq.s32.totalorder %s20, 3
      %p51 = por %p49, %p50
      %p52 = scmp.ne.s32.totalorder %s44, %s47
      %p53 = scmp.eq.s32.totalorder %s20, 0
      %p54 = por %p52, %p53
      %p55 = scmp.ne.s32.totalorder %s44, %s47
      %p56 = scmp.eq.s32.totalorder %s25, 3
      %p57 = por %p55, %p56
      %p58 = scmp.ne.s32.totalorder %s47, %s48
      %p59 = scmp.eq.s32.totalorder %s25, 0
      %p60 = por %p58, %p59
      %p61 = scmp.ne.s32.totalorder %s47, %s48
      %p62 = scmp.eq.s32.totalorder %s26, 3
      %p63 = por %p61, %p62
      %p65 = scmp.ne.s32.totalorder %s48, %s64
      %p66 = scmp.eq.s32.totalorder %s26, 0
      %p67 = por %p65, %p66
      %s69 = sadd.s32 %s68, 1
      %p72 = scmp.eq.s32.totalorder %s20, 3
      %p73 = scmp.ne.s32.totalorder %s68, %s70
      %p74 = scmp.eq.s32.totalorder %s20, 0
      %p75 = por %p73, %p74
      %p76 = scmp.ne.s32.totalorder %s68, %s70
      %p77 = scmp.eq.s32.totalorder %s25, 3
      %p78 = por %p76, %p77
      %p79 = scmp.ne.s32.totalorder %s70, %s71
      %p80 = scmp.eq.s32.totalorder %s25, 0
      %p81 = por %p79, %p80
      %p82 = scmp.ne.s32.totalorder %s70, %s71
      %p83 = scmp.eq.s32.totalorder %s26, 3
      %p84 = por %p82, %p83
      %p86 = scmp.ne.s32.totalorder %s71, %s85
      %p87 = scmp.eq.s32.totalorder %s26, 0
      %p88 = por %p86, %p87
      %s90 = sadd.s32 %s89, 1
      %p93 = scmp.eq.s32.totalorder %s20, 3
      %p94 = scmp.ne.s32.totalorder %s89, %s91
      %p95 = scmp.eq.s32.totalorder %s20, 0
      %p96 = por %p94, %p95
      %p97 = scmp.ne.s32.totalorder %s89, %s91
      %p98 = scmp.eq.s32.totalorder %s25, 3
      %p99 = por %p97, %p98
      %p100 = scmp.ne.s32.totalorder %s91, %s92
      %p101 = scmp.eq.s32.totalorder %s25, 0
      %p102 = por %p100, %p101
      %p103 = scmp.ne.s32.totalorder %s91, %s92
      %p104 = scmp.eq.s32.totalorder %s26, 3
      %p105 = por %p103, %p104
      %p107 = scmp.ne.s32.totalorder %s92, %s106
      %p108 = scmp.eq.s32.totalorder %s26, 0
      %p109 = por %p107, %p108
      %s110 = ssub.s32 %s27, %s39
      %s111 = ssub.s32 %s28, %s35
      %s112 = sor.u32 %s110, %s111
      %p113 = scmp.eq.s32.totalorder %s112, 0
      %s115 = sadd.s32 %s114, 1
      %s116 = scalar_select %p113, %s114, %s115
      %p119 = pneg %p113
      %p120 = scmp.eq.s32.totalorder %s20, 3
      %p121 = por %p119, %p120
      %p122 = scmp.ne.s32.totalorder %s114, %s117
      %p123 = scmp.eq.s32.totalorder %s20, 0
      %p124 = por %p122, %p123
      %p125 = scmp.ne.s32.totalorder %s114, %s117
      %p126 = scmp.eq.s32.totalorder %s25, 3
      %p127 = por %p125, %p126
      %p128 = scmp.ne.s32.totalorder %s117, %s118
      %p129 = scmp.eq.s32.totalorder %s25, 0
      %p130 = por %p128, %p129
      %p131 = scmp.ne.s32.totalorder %s117, %s118
      %p132 = scmp.eq.s32.totalorder %s26, 3
      %p133 = por %p131, %p132
      %p135 = scmp.ne.s32.totalorder %s118, %s134
      %p136 = scmp.eq.s32.totalorder %s26, 0
      %p137 = por %p135, %p136
      %s138 = ssub.s32 %s27, %s39
      %s139 = ssub.s32 %s28, %s35
      %s140 = sor.u32 %s138, %s139
      %p141 = scmp.eq.s32.totalorder %s140, 0
      %s143 = sadd.s32 %s142, 1
      %s144 = scalar_select %p141, %s142, %s143
      %p147 = pneg %p141
      %p148 = scmp.eq.s32.totalorder %s20, 3
      %p149 = por %p147, %p148
      %p150 = scmp.ne.s32.totalorder %s142, %s145
      %p151 = scmp.eq.s32.totalorder %s20, 0
      %p152 = por %p150, %p151
      %p153 = scmp.ne.s32.totalorder %s142, %s145
      %p154 = scmp.eq.s32.totalorder %s25, 3
      %p155 = por %p153, %p154
      %p156 = scmp.ne.s32.totalorder %s145, %s146
      %p157 = scmp.eq.s32.totalorder %s25, 0
      %p158 = por %p156, %p157
      %p159 = scmp.ne.s32.totalorder %s145, %s146
      %p160 = scmp.eq.s32.totalorder %s26, 3
      %p161 = por %p159, %p160
      %p163 = scmp.ne.s32.totalorder %s146, %s162
      %p164 = scmp.eq.s32.totalorder %s26, 0
      %p165 = por %p163, %p164
      %p166 = scmp.le.s32.totalorder 1, %s20
      %p167 = scmp.lt.s32.totalorder %s20, 5
      %p168 = pnand %p166, %p167
      %p169 = pneg %p168
      // Predicated region
      $region9: #{tpu_custom_call.1} parent=5 // pred_check
        _
      $region10: #{tpu_custom_call.1} parent=5 // pred_check_branch
        %171 = sbr.rel (%p168) target = $region12
      $region11: #{tpu_custom_call.1} parent=5 // pred_region
        %s172 = ssub.s32 %s20, 1
        // Predicated region
        $region13: #{tpu_custom_call.1} parent=11 // pred_check
          %p173 = pneg %p81
        $region14: #{tpu_custom_call.1} parent=11 // pred_check_branch
          %175 = sbr.rel (%p173) target = $region16
        $region15: #{tpu_custom_call.1} parent=11 // pred_region
          _
        $region16: #{tpu_custom_call.1} parent=11 // pred_fallthru
          _
        // Predicated region
        $region17: #{tpu_custom_call.1} parent=11 // pred_check
          %p176 = pneg %p102
        $region18: #{tpu_custom_call.1} parent=11 // pred_check_branch
          %178 = sbr.rel (%p176) target = $region20
        $region19: #{tpu_custom_call.1} parent=11 // pred_region
          _
        $region20: #{tpu_custom_call.1} parent=11 // pred_fallthru
          _
      $region12: #{tpu_custom_call.1} parent=5 // pred_fallthru
        _
      %p179 = scmp.lt.s32.totalorder %s20, 4
      // Predicated region
      $region21: #{tpu_custom_call.1} parent=5 // pred_check
        %p180 = pneg %p179
      $region22: #{tpu_custom_call.1} parent=5 // pred_check_branch
        %182 = sbr.rel (%p180) target = $region24
      $region23: #{tpu_custom_call.1} parent=5 // pred_region
        // Predicated region
        $region25: #{tpu_custom_call.1} parent=23 // pred_check
          %p183 = pneg %p54
        $region26: #{tpu_custom_call.1} parent=23 // pred_check_branch
          %185 = sbr.rel (%p183) target = $region28
        $region27: #{tpu_custom_call.1} parent=23 // pred_region
          %s186 = sand.u32 %s44, 1
          %s187 = scalar_lea.sflag [#allocation3], %s186
          %s188 = sand.u32 %s44, 1
          %s189 = smul.addr %s188, 128
          %s190 = scalar_lea.vmem [#allocation2], %s189
          %s192 = ssub.s32 2048, 2048
          %193 = vsyncadd %s187, %s192
          %s194 = smul.addr %s27, 32
          %s195 = sadd.s32 %s28, %s194
          %s196 = smul.addr %s195, 128
          %s197 = scalar_lea.hbm %s0, %s196
          %s198 = sshll.u32 %s190, 4
          %s199 = int_to_ptr.vmem [resolvable:$true] %s198
          %204 = dma.hbm_to_vmem [thread:$0]  %s197, 2048, %s199, %s187, 256, 128, 8
        $region28: #{tpu_custom_call.1} parent=23 // pred_fallthru
          _
      $region24: #{tpu_custom_call.1} parent=5 // pred_fallthru
        _
      %p205 = scmp.le.s32.totalorder 1, %s20
      %p206 = scmp.lt.s32.totalorder %s20, 5
      %p207 = pnand %p205, %p206
      %p208 = pneg %p207
      // Predicated region
      $region29: #{tpu_custom_call.1} parent=5 // pred_check
        _
      $region30: #{tpu_custom_call.1} parent=5 // pred_check_branch
        %210 = sbr.rel (%p207) target = $region32
      $region31: #{tpu_custom_call.1} parent=5 // pred_region
        %s211 = ssub.s32 %s20, 1
        %s212 = sand.u32 %s47, 1
        %s213 = scalar_lea.sflag [#allocation3], %s212
        %s214 = sand.u32 %s47, 1
        %s215 = smul.addr %s214, 128
        %s216 = scalar_lea.vmem [#allocation2], %s215
        // Predicated region
        $region33: #{tpu_custom_call.1} parent=31 // pred_check
          %p217 = pneg %p60
        $region34: #{tpu_custom_call.1} parent=31 // pred_check_branch
          %219 = sbr.rel (%p217) target = $region36
        $region35: #{tpu_custom_call.1} parent=31 // pred_region
          %220 = dma.done %s213, 2048
        $region36: #{tpu_custom_call.1} parent=31 // pred_fallthru
          _
        %s221 = sand.u32 %s47, 1
        %s222 = scalar_lea.sflag [#allocation3], %s221
        %s223 = sand.u32 %s47, 1
        %s224 = smul.addr %s223, 128
        %s225 = scalar_lea.vmem [#allocation2], %s224
        %p226 = pneg %p60
        %p227 = pneg %p57
        %p228 = pneg %p81
        %p229 = pneg %p78
        %p230 = pneg %p102
        %p231 = pneg %p99
        %p232 = pneg %p130
        %p233 = pneg %p127
        %s234 = sand.u32 %s117, 1
        %s235 = scalar_lea.sflag [#allocation4], %s234
        %s236 = sand.u32 %s117, 1
        %s237 = smul.addr %s236, 128
        %s238 = scalar_lea.vmem [#allocation5], %s237
        %p239 = pneg %p158
        %p240 = pneg %p155
        %s241 = sand.u32 %s145, 1
        %s242 = scalar_lea.sflag [#allocation7], %s241
        %s243 = sand.u32 %s145, 1
        %s244 = smul.addr %s243, 2
        %s245 = scalar_lea.vmem [#allocation6], %s244
        %v246 = vld [vmem:[%s1] sm:$0xff]
        %v247 = vld [vmem:[%s1 + $0x8] sm:$0xff]
        %v248 = vld [vmem:[%s1 + $0x10] sm:$0xff]
        %v249 = vld [vmem:[%s1 + $0x18] sm:$0xff]
        %v250 = vld [vmem:[%s1 + $0x20] sm:$0xff]
        %v251 = vld [vmem:[%s1 + $0x28] sm:$0xff]
        %v252 = vld [vmem:[%s1 + $0x30] sm:$0xff]
        %v253 = vld [vmem:[%s1 + $0x38] sm:$0xff]
        %v254 = vld [vmem:[%s1 + $0x40] sm:$0xff]
        %v255 = vld [vmem:[%s1 + $0x48] sm:$0xff]
        %v256 = vld [vmem:[%s1 + $0x50] sm:$0xff]
        %v257 = vld [vmem:[%s1 + $0x58] sm:$0xff]
        %v258 = vld [vmem:[%s1 + $0x60] sm:$0xff]
        %v259 = vld [vmem:[%s1 + $0x68] sm:$0xff]
        %v260 = vld [vmem:[%s1 + $0x70] sm:$0xff]
        %v261 = vld [vmem:[%s1 + $0x78] sm:$0xff]
        %v262 = vld [vmem:[%s2] sm:$0xff]
        %v263 = vld [vmem:[%s2 + $0x8] sm:$0xff]
        %v264 = vld [vmem:[%s2 + $0x10] sm:$0xff]
        %v265 = vld [vmem:[%s2 + $0x18] sm:$0xff]
        %v266 = vld [vmem:[%s2 + $0x20] sm:$0xff]
        %v267 = vld [vmem:[%s2 + $0x28] sm:$0xff]
        %v268 = vld [vmem:[%s2 + $0x30] sm:$0xff]
        %v269 = vld [vmem:[%s2 + $0x38] sm:$0xff]
        %v270 = vld [vmem:[%s2 + $0x40] sm:$0xff]
        %v271 = vld [vmem:[%s2 + $0x48] sm:$0xff]
        %v272 = vld [vmem:[%s2 + $0x50] sm:$0xff]
        %v273 = vld [vmem:[%s2 + $0x58] sm:$0xff]
        %v274 = vld [vmem:[%s2 + $0x60] sm:$0xff]
        %v275 = vld [vmem:[%s2 + $0x68] sm:$0xff]
        %v276 = vld [vmem:[%s2 + $0x70] sm:$0xff]
        %v277 = vld [vmem:[%s2 + $0x78] sm:$0xff]
        %v278 = vlaneseq
        %v279 = vshrl.u32 %v278, 7
        %v280 = vadd.s32 %v279, 8
        %v281 = vadd.s32 %v279, 16
        %v282 = vadd.s32 %v279, 24
        %v283 = vadd.s32 %v279, 32
        %v284 = vadd.s32 %v279, 40
        %v285 = vadd.s32 %v279, 48
        %v286 = vadd.s32 %v279, 56
        %v287 = vadd.s32 %v279, 64
        %v288 = vadd.s32 %v279, 72
        %v289 = vadd.s32 %v279, 80
        %v290 = vadd.s32 %v279, 88
        %v291 = vadd.s32 %v279, 96
        %v292 = vadd.s32 %v279, 104
        %v293 = vadd.s32 %v279, 112
        %v294 = vadd.s32 %v279, 120
        %v295 = vld [vmem:[%s216] sm:$0xff]
        %v296 = vld [vmem:[%s216 + $0x8] sm:$0xff]
        %v297 = vld [vmem:[%s216 + $0x10] sm:$0xff]
        %v298 = vld [vmem:[%s216 + $0x18] sm:$0xff]
        %v299 = vld [vmem:[%s216 + $0x20] sm:$0xff]
        %v300 = vld [vmem:[%s216 + $0x28] sm:$0xff]
        %v301 = vld [vmem:[%s216 + $0x30] sm:$0xff]
        %v302 = vld [vmem:[%s216 + $0x38] sm:$0xff]
        %v303 = vld [vmem:[%s216 + $0x40] sm:$0xff]
        %v304 = vld [vmem:[%s216 + $0x48] sm:$0xff]
        %v305 = vld [vmem:[%s216 + $0x50] sm:$0xff]
        %v306 = vld [vmem:[%s216 + $0x58] sm:$0xff]
        %v307 = vld [vmem:[%s216 + $0x60] sm:$0xff]
        %v308 = vld [vmem:[%s216 + $0x68] sm:$0xff]
        %v309 = vld [vmem:[%s216 + $0x70] sm:$0xff]
        %v310 = vld [vmem:[%s216 + $0x78] sm:$0xff]
        %311 = vmatprep.subr.mxu0 0.0
        %312 = vmatpush1.msra.mxu0 %v295
        %313 = vmatprep.subr.mxu0 0.0
        %314 = vmatpush1.msra.mxu0 %v296
        %315 = vmatprep.subr.mxu0 0.0
        %316 = vmatpush1.msra.mxu0 %v297
        %317 = vmatprep.subr.mxu0 0.0
        %318 = vmatpush1.msra.mxu0 %v298
        %319 = vmatprep.subr.mxu0 0.0
        %320 = vmatpush1.msra.mxu0 %v299
        %321 = vmatprep.subr.mxu0 0.0
        %322 = vmatpush1.msra.mxu0 %v300
        %323 = vmatprep.subr.mxu0 0.0
        %324 = vmatpush1.msra.mxu0 %v301
        %325 = vmatprep.subr.mxu0 0.0
        %326 = vmatpush1.msra.mxu0 %v302
        %327 = vmatprep.subr.mxu0 0.0
        %328 = vmatpush1.msra.mxu0 %v303
        %329 = vmatprep.subr.mxu0 0.0
        %330 = vmatpush1.msra.mxu0 %v304
        %331 = vmatprep.subr.mxu0 0.0
        %332 = vmatpush1.msra.mxu0 %v305
        %333 = vmatprep.subr.mxu0 0.0
        %334 = vmatpush1.msra.mxu0 %v306
        %335 = vmatprep.subr.mxu0 0.0
        %336 = vmatpush1.msra.mxu0 %v307
        %337 = vmatprep.subr.mxu0 0.0
        %338 = vmatpush1.msra.mxu0 %v308
        %339 = vmatprep.subr.mxu0 0.0
        %340 = vmatpush1.msra.mxu0 %v309
        %341 = vmatprep.subr.mxu0 0.0
        %342 = vmatpush1.msra.mxu0 %v310
        %343 = vmatprep.subr.mxu0 0.0
        %344 = vmatpush1.msra.mxu0 0.0
        %345 = vmatprep.subr.mxu0 0.0
        %346 = vmatpush1.msra.mxu0 0.0
        %347 = vmatprep.subr.mxu0 0.0
        %348 = vmatpush1.msra.mxu0 0.0
        %349 = vmatprep.subr.mxu0 0.0
        %350 = vmatpush1.msra.mxu0 0.0
        %351 = vmatprep.subr.mxu0 0.0
        %352 = vmatpush1.msra.mxu0 0.0
        %353 = vmatprep.subr.mxu0 0.0
        %354 = vmatpush1.msra.mxu0 0.0
        %355 = vmatprep.subr.mxu0 0.0
        %356 = vmatpush1.msra.mxu0 0.0
        %357 = vmatprep.subr.mxu0 0.0
        %358 = vmatpush1.msra.mxu0 0.0
        %359 = vmatprep.subr.mxu0 0.0
        %360 = vmatpush1.msra.mxu0 0.0
        %361 = vmatprep.subr.mxu0 0.0
        %362 = vmatpush1.msra.mxu0 0.0
        %363 = vmatprep.subr.mxu0 0.0
        %364 = vmatpush1.msra.mxu0 0.0
        %365 = vmatprep.subr.mxu0 0.0
        %366 = vmatpush1.msra.mxu0 0.0
        %367 = vmatprep.subr.mxu0 0.0
        %368 = vmatpush1.msra.mxu0 0.0
        %369 = vmatprep.subr.mxu0 0.0
        %370 = vmatpush1.msra.mxu0 0.0
        %371 = vmatprep.subr.mxu0 0.0
        %372 = vmatpush1.msra.mxu0 0.0
        %373 = vmatprep.subr.mxu0 0.0
        %374 = vmatpush1.msra.mxu0 0.0
        %375 = vmatprep.mubr.f32.mxu0 0.0
        %376 = vmatmul.mubr.f32.gmra.mrb[0].mxu0 %v246
        %v377 = vpop.f32.mrb[0].mxu0
        %v378 = vadd.f32 0.0, %v377
        %v379 = vpop.f32.mrb[0].mxu0
        %380 = vmatprep.mubr.f32.mxu0 0.0
        %381 = vmatmul.mubr.f32.gmra.mrb[0].mxu0 %v247
        %v382 = vpop.f32.mrb[0].mxu0
        %v383 = vadd.f32 0.0, %v382
        %v384 = vpop.f32.mrb[0].mxu0
        %385 = vmatprep.mubr.f32.mxu0 0.0
        %386 = vmatmul.mubr.f32.gmra.mrb[0].mxu0 %v248
        %v387 = vpop.f32.mrb[0].mxu0
        %v388 = vadd.f32 0.0, %v387
        %v389 = vpop.f32.mrb[0].mxu0
        %390 = vmatprep.mubr.f32.mxu0 0.0
        %391 = vmatmul.mubr.f32.gmra.mrb[0].mxu0 %v249
        %v392 = vpop.f32.mrb[0].mxu0
        %v393 = vadd.f32 0.0, %v392
        %v394 = vpop.f32.mrb[0].mxu0
        %395 = vmatprep.mubr.f32.mxu0 0.0
        %396 = vmatmul.mubr.f32.gmra.mrb[0].mxu0 %v250
        %v397 = vpop.f32.mrb[0].mxu0
        %v398 = vadd.f32 0.0, %v397
        %v399 = vpop.f32.mrb[0].mxu0
        %400 = vmatprep.mubr.f32.mxu0 0.0
        %401 = vmatmul.mubr.f32.gmra.mrb[0].mxu0 %v251
        %v402 = vpop.f32.mrb[0].mxu0
        %v403 = vadd.f32 0.0, %v402
        %v404 = vpop.f32.mrb[0].mxu0
        %405 = vmatprep.mubr.f32.mxu0 0.0
        %406 = vmatmul.mubr.f32.gmra.mrb[0].mxu0 %v252
        %v407 = vpop.f32.mrb[0].mxu0
        %v408 = vadd.f32 0.0, %v407
        %v409 = vpop.f32.mrb[0].mxu0
        %410 = vmatprep.mubr.f32.mxu0 0.0
        %411 = vmatmul.mubr.f32.gmra.mrb[0].mxu0 %v253
        %v412 = vpop.f32.mrb[0].mxu0
        %v413 = vadd.f32 0.0, %v412
        %v414 = vpop.f32.mrb[0].mxu0
        %415 = vmatprep.mubr.f32.mxu0 0.0
        %416 = vmatmul.mubr.f32.gmra.mrb[0].mxu0 %v254
        %v417 = vpop.f32.mrb[0].mxu0
        %v418 = vadd.f32 0.0, %v417
        %v419 = vpop.f32.mrb[0].mxu0
        %420 = vmatprep.mubr.f32.mxu0 0.0
        %421 = vmatmul.mubr.f32.gmra.mrb[0].mxu0 %v255
        %v422 = vpop.f32.mrb[0].mxu0
        %v423 = vadd.f32 0.0, %v422
        %v424 = vpop.f32.mrb[0].mxu0
        %425 = vmatprep.mubr.f32.mxu0 0.0
        %426 = vmatmul.mubr.f32.gmra.mrb[0].mxu0 %v256
        %v427 = vpop.f32.mrb[0].mxu0
        %v428 = vadd.f32 0.0, %v427
        %v429 = vpop.f32.mrb[0].mxu0
        %430 = vmatprep.mubr.f32.mxu0 0.0
        %431 = vmatmul.mubr.f32.gmra.mrb[0].mxu0 %v257
        %v432 = vpop.f32.mrb[0].mxu0
        %v433 = vadd.f32 0.0, %v432
        %v434 = vpop.f32.mrb[0].mxu0
        %435 = vmatprep.mubr.f32.mxu0 0.0
        %436 = vmatmul.mubr.f32.gmra.mrb[0].mxu0 %v258
        %v437 = vpop.f32.mrb[0].mxu0
        %v438 = vadd.f32 0.0, %v437
        %v439 = vpop.f32.mrb[0].mxu0
        %440 = vmatprep.mubr.f32.mxu0 0.0
        %441 = vmatmul.mubr.f32.gmra.mrb[0].mxu0 %v259
        %v442 = vpop.f32.mrb[0].mxu0
        %v443 = vadd.f32 0.0, %v442
        %v444 = vpop.f32.mrb[0].mxu0
        %445 = vmatprep.mubr.f32.mxu0 0.0
        %446 = vmatmul.mubr.f32.gmra.mrb[0].mxu0 %v260
        %v447 = vpop.f32.mrb[0].mxu0
        %v448 = vadd.f32 0.0, %v447
        %v449 = vpop.f32.mrb[0].mxu0
        %450 = vmatprep.mubr.f32.mxu0 0.0
        %451 = vmatmul.mubr.f32.gmra.mrb[0].mxu0 %v261
        %v452 = vpop.f32.mrb[0].mxu0
        %v453 = vadd.f32 0.0, %v452
        %v454 = vpop.f32.mrb[0].mxu0
        %455 = vdwg.mxu0
        %457 = vset.pattern.permute.xlu0 0
        %458 = vperm.xlu0 %457, %v262
        %v459 = vpop.permute.xlu0 %458
        %462 = vset.pattern.permute.xlu0 0
        %463 = vperm.xlu0 %462, %v263
        %v464 = vpop.permute.xlu0 %463
        %467 = vset.pattern.permute.xlu0 0
        %468 = vperm.xlu0 %467, %v264
        %v469 = vpop.permute.xlu0 %468
        %472 = vset.pattern.permute.xlu0 0
        %473 = vperm.xlu0 %472, %v265
        %v474 = vpop.permute.xlu0 %473
        %477 = vset.pattern.permute.xlu0 0
        %478 = vperm.xlu0 %477, %v266
        %v479 = vpop.permute.xlu0 %478
        %482 = vset.pattern.permute.xlu0 0
        %483 = vperm.xlu0 %482, %v267
        %v484 = vpop.permute.xlu0 %483
        %487 = vset.pattern.permute.xlu0 0
        %488 = vperm.xlu0 %487, %v268
        %v489 = vpop.permute.xlu0 %488
        %492 = vset.pattern.permute.xlu0 0
        %493 = vperm.xlu0 %492, %v269
        %v494 = vpop.permute.xlu0 %493
        %497 = vset.pattern.permute.xlu0 0
        %498 = vperm.xlu0 %497, %v270
        %v499 = vpop.permute.xlu0 %498
        %502 = vset.pattern.permute.xlu0 0
        %503 = vperm.xlu0 %502, %v271
        %v504 = vpop.permute.xlu0 %503
        %507 = vset.pattern.permute.xlu0 0
        %508 = vperm.xlu0 %507, %v272
        %v509 = vpop.permute.xlu0 %508
        %512 = vset.pattern.permute.xlu0 0
        %513 = vperm.xlu0 %512, %v273
        %v514 = vpop.permute.xlu0 %513
        %517 = vset.pattern.permute.xlu0 0
        %518 = vperm.xlu0 %517, %v274
        %v519 = vpop.permute.xlu0 %518
        %522 = vset.pattern.permute.xlu0 0
        %523 = vperm.xlu0 %522, %v275
        %v524 = vpop.permute.xlu0 %523
        %527 = vset.pattern.permute.xlu0 0
        %528 = vperm.xlu0 %527, %v276
        %v529 = vpop.permute.xlu0 %528
        %532 = vset.pattern.permute.xlu0 0
        %533 = vperm.xlu0 %532, %v277
        %v534 = vpop.permute.xlu0 %533
        %v536 = vsub.f32 %v459, %v378
        %v537 = vsub.f32 %v464, %v383
        %v538 = vsub.f32 %v469, %v388
        %v539 = vsub.f32 %v474, %v393
        %v540 = vsub.f32 %v479, %v398
        %v541 = vsub.f32 %v484, %v403
        %v542 = vsub.f32 %v489, %v408
        %v543 = vsub.f32 %v494, %v413
        %v544 = vsub.f32 %v499, %v418
        %v545 = vsub.f32 %v504, %v423
        %v546 = vsub.f32 %v509, %v428
        %v547 = vsub.f32 %v514, %v433
        %v548 = vsub.f32 %v519, %v438
        %v549 = vsub.f32 %v524, %v443
        %v550 = vsub.f32 %v529, %v448
        %v551 = vsub.f32 %v534, %v453
        %v552 = vmin.f32 %v536, %v540
        %v553 = vmin.f32 %v537, %v541
        %v554 = vmin.f32 %v538, %v542
        %v555 = vmin.f32 %v539, %v543
        %v556 = vmin.f32 %v552, %v544
        %v557 = vmin.f32 %v553, %v545
        %v558 = vmin.f32 %v554, %v546
        %v559 = vmin.f32 %v555, %v547
        %v560 = vmin.f32 %v556, %v548
        %v561 = vmin.f32 %v557, %v549
        %v562 = vmin.f32 %v558, %v550
        %v563 = vmin.f32 %v559, %v551
        %v564 = vmin.f32 %v560, %v561
        %v565 = vmin.f32 %v562, %v563
        %v566 = vmin.f32 %v564, %v565
        %v567 = vrot.slane %v566, 4
        %v568 = vmin.f32 %v566, %v567
        %v569 = vrot.slane %v568, 2
        %v570 = vmin.f32 %v568, %v569
        %v571 = vrot.slane %v570, 1
        %v572 = vmin.f32 %v570, %v571
        %vm573 = vcmp.le.f32.partialorder %v536, %v572
        %vm574 = vcmp.le.f32.partialorder %v537, %v572
        %vm575 = vcmp.le.f32.partialorder %v538, %v572
        %vm576 = vcmp.le.f32.partialorder %v539, %v572
        %vm577 = vcmp.le.f32.partialorder %v540, %v572
        %vm578 = vcmp.le.f32.partialorder %v541, %v572
        %vm579 = vcmp.le.f32.partialorder %v542, %v572
        %vm580 = vcmp.le.f32.partialorder %v543, %v572
        %vm581 = vcmp.le.f32.partialorder %v544, %v572
        %vm582 = vcmp.le.f32.partialorder %v545, %v572
        %vm583 = vcmp.le.f32.partialorder %v546, %v572
        %vm584 = vcmp.le.f32.partialorder %v547, %v572
        %vm585 = vcmp.le.f32.partialorder %v548, %v572
        %vm586 = vcmp.le.f32.partialorder %v549, %v572
        %vm587 = vcmp.le.f32.partialorder %v550, %v572
        %vm588 = vcmp.le.f32.partialorder %v551, %v572
        %v589 = vsel %vm573, %v279, 128
        %v590 = vsel %vm574, %v280, 128
        %v591 = vsel %vm575, %v281, 128
        %v592 = vsel %vm576, %v282, 128
        %v593 = vsel %vm577, %v283, 128
        %v594 = vsel %vm578, %v284, 128
        %v595 = vsel %vm579, %v285, 128
        %v596 = vsel %vm580, %v286, 128
        %v597 = vsel %vm581, %v287, 128
        %v598 = vsel %vm582, %v288, 128
        %v599 = vsel %vm583, %v289, 128
        %v600 = vsel %vm584, %v290, 128
        %v601 = vsel %vm585, %v291, 128
        %v602 = vsel %vm586, %v292, 128
        %v603 = vsel %vm587, %v293, 128
        %v604 = vsel %vm588, %v294, 128
        %vm605 = vcmp.lt.s32.totalorder %v589, %v593
        %v606 = vsel %vm605, %v589, %v593
        %vm607 = vcmp.lt.s32.totalorder %v590, %v594
        %v608 = vsel %vm607, %v590, %v594
        %vm609 = vcmp.lt.s32.totalorder %v591, %v595
        %v610 = vsel %vm609, %v591, %v595
        %vm611 = vcmp.lt.s32.totalorder %v592, %v596
        %v612 = vsel %vm611, %v592, %v596
        %vm613 = vcmp.lt.s32.totalorder %v606, %v597
        %v614 = vsel %vm613, %v606, %v597
        %vm615 = vcmp.lt.s32.totalorder %v608, %v598
        %v616 = vsel %vm615, %v608, %v598
        %vm617 = vcmp.lt.s32.totalorder %v610, %v599
        %v618 = vsel %vm617, %v610, %v599
        %vm619 = vcmp.lt.s32.totalorder %v612, %v600
        %v620 = vsel %vm619, %v612, %v600
        %vm621 = vcmp.lt.s32.totalorder %v614, %v601
        %v622 = vsel %vm621, %v614, %v601
        %vm623 = vcmp.lt.s32.totalorder %v616, %v602
        %v624 = vsel %vm623, %v616, %v602
        %vm625 = vcmp.lt.s32.totalorder %v618, %v603
        %v626 = vsel %vm625, %v618, %v603
        %vm627 = vcmp.lt.s32.totalorder %v620, %v604
        %v628 = vsel %vm627, %v620, %v604
        %vm629 = vcmp.lt.s32.totalorder %v622, %v624
        %v630 = vsel %vm629, %v622, %v624
        %vm631 = vcmp.lt.s32.totalorder %v626, %v628
        %v632 = vsel %vm631, %v626, %v628
        %vm633 = vcmp.lt.s32.totalorder %v630, %v632
        %v634 = vsel %vm633, %v630, %v632
        %v635 = vrot.slane %v634, 4
        %vm636 = vcmp.lt.s32.totalorder %v634, %v635
        %v637 = vsel %vm636, %v634, %v635
        %v638 = vrot.slane %v637, 2
        %vm639 = vcmp.lt.s32.totalorder %v637, %v638
        %v640 = vsel %vm639, %v637, %v638
        %v641 = vrot.slane %v640, 1
        %vm642 = vcmp.lt.s32.totalorder %v640, %v641
        %v643 = vsel %vm642, %v640, %v641
        %vm644 = vcmp.eq.s32.totalorder %v279, %v643
        %vm645 = vcmp.eq.s32.totalorder %v280, %v643
        %vm646 = vcmp.eq.s32.totalorder %v281, %v643
        %vm647 = vcmp.eq.s32.totalorder %v282, %v643
        %vm648 = vcmp.eq.s32.totalorder %v283, %v643
        %vm649 = vcmp.eq.s32.totalorder %v284, %v643
        %vm650 = vcmp.eq.s32.totalorder %v285, %v643
        %vm651 = vcmp.eq.s32.totalorder %v286, %v643
        %vm652 = vcmp.eq.s32.totalorder %v287, %v643
        %vm653 = vcmp.eq.s32.totalorder %v288, %v643
        %vm654 = vcmp.eq.s32.totalorder %v289, %v643
        %vm655 = vcmp.eq.s32.totalorder %v290, %v643
        %vm656 = vcmp.eq.s32.totalorder %v291, %v643
        %vm657 = vcmp.eq.s32.totalorder %v292, %v643
        %vm658 = vcmp.eq.s32.totalorder %v293, %v643
        %vm659 = vcmp.eq.s32.totalorder %v294, %v643
        %v660 = vsel %vm644, 1, 0
        %v661 = vsel %vm645, 1, 0
        %v662 = vsel %vm646, 1, 0
        %v663 = vsel %vm647, 1, 0
        %v664 = vsel %vm648, 1, 0
        %v665 = vsel %vm649, 1, 0
        %v666 = vsel %vm650, 1, 0
        %v667 = vsel %vm651, 1, 0
        %v668 = vsel %vm652, 1, 0
        %v669 = vsel %vm653, 1, 0
        %v670 = vsel %vm654, 1, 0
        %v671 = vsel %vm655, 1, 0
        %v672 = vsel %vm656, 1, 0
        %v673 = vsel %vm657, 1, 0
        %v674 = vsel %vm658, 1, 0
        %v675 = vsel %vm659, 1, 0
        %v676 = vcvt.s32.f32 %v660
        %v677 = vcvt.s32.f32 %v661
        %v678 = vcvt.s32.f32 %v662
        %v679 = vcvt.s32.f32 %v663
        %v680 = vcvt.s32.f32 %v664
        %v681 = vcvt.s32.f32 %v665
        %v682 = vcvt.s32.f32 %v666
        %v683 = vcvt.s32.f32 %v667
        %v684 = vcvt.s32.f32 %v668
        %v685 = vcvt.s32.f32 %v669
        %v686 = vcvt.s32.f32 %v670
        %v687 = vcvt.s32.f32 %v671
        %v688 = vcvt.s32.f32 %v672
        %v689 = vcvt.s32.f32 %v673
        %v690 = vcvt.s32.f32 %v674
        %v691 = vcvt.s32.f32 %v675
        %692 = vxpose.xlu0.b32.start [1/16] %v246, 128
        %693 = vxpose.xlu0.b32.cont [2/16] %v247, 128
        %694 = vxpose.xlu0.b32.cont [3/16] %v248, 128
        %695 = vxpose.xlu0.b32.cont [4/16] %v249, 128
        %696 = vxpose.xlu0.b32.cont [5/16] %v250, 128
        %697 = vxpose.xlu0.b32.cont [6/16] %v251, 128
        %698 = vxpose.xlu0.b32.cont [7/16] %v252, 128
        %699 = vxpose.xlu0.b32.cont [8/16] %v253, 128
        %700 = vxpose.xlu0.b32.cont [9/16] %v254, 128
        %701 = vxpose.xlu0.b32.cont [10/16] %v255, 128
        %702 = vxpose.xlu0.b32.cont [11/16] %v256, 128
        %703 = vxpose.xlu0.b32.cont [12/16] %v257, 128
        %704 = vxpose.xlu0.b32.cont [13/16] %v258, 128
        %705 = vxpose.xlu0.b32.cont [14/16] %v259, 128
        %706 = vxpose.xlu0.b32.cont [15/16] %v260, 128
        %707 = vxpose.xlu0.b32.end [16/16] %v261, 128
        %v708 = vpop.trf.xlu0
        %v709 = vpop.trf.xlu0
        %v710 = vpop.trf.xlu0
        %v711 = vpop.trf.xlu0
        %v712 = vpop.trf.xlu0
        %v713 = vpop.trf.xlu0
        %v714 = vpop.trf.xlu0
        %v715 = vpop.trf.xlu0
        %v716 = vpop.trf.xlu0
        %v717 = vpop.trf.xlu0
        %v718 = vpop.trf.xlu0
        %v719 = vpop.trf.xlu0
        %v720 = vpop.trf.xlu0
        %v721 = vpop.trf.xlu0
        %v722 = vpop.trf.xlu0
        %v723 = vpop.trf.xlu0
        %724 = vmatprep.subr.mxu0 0.0
        %725 = vmatpush1.msra.mxu0 %v676
        %726 = vmatprep.subr.mxu0 0.0
        %727 = vmatpush1.msra.mxu0 %v677
        %728 = vmatprep.subr.mxu0 0.0
        %729 = vmatpush1.msra.mxu0 %v678
        %730 = vmatprep.subr.mxu0 0.0
        %731 = vmatpush1.msra.mxu0 %v679
        %732 = vmatprep.subr.mxu0 0.0
        %733 = vmatpush1.msra.mxu0 %v680
        %734 = vmatprep.subr.mxu0 0.0
        %735 = vmatpush1.msra.mxu0 %v681
        %736 = vmatprep.subr.mxu0 0.0
        %737 = vmatpush1.msra.mxu0 %v682
        %738 = vmatprep.subr.mxu0 0.0
        %739 = vmatpush1.msra.mxu0 %v683
        %740 = vmatprep.subr.mxu0 0.0
        %741 = vmatpush1.msra.mxu0 %v684
        %742 = vmatprep.subr.mxu0 0.0
        %743 = vmatpush1.msra.mxu0 %v685
        %744 = vmatprep.subr.mxu0 0.0
        %745 = vmatpush1.msra.mxu0 %v686
        %746 = vmatprep.subr.mxu0 0.0
        %747 = vmatpush1.msra.mxu0 %v687
        %748 = vmatprep.subr.mxu0 0.0
        %749 = vmatpush1.msra.mxu0 %v688
        %750 = vmatprep.subr.mxu0 0.0
        %751 = vmatpush1.msra.mxu0 %v689
        %752 = vmatprep.subr.mxu0 0.0
        %753 = vmatpush1.msra.mxu0 %v690
        %754 = vmatprep.subr.mxu0 0.0
        %755 = vmatpush1.msra.mxu0 %v691
        %756 = vmatprep.subr.mxu0 0.0
        %757 = vmatpush1.msra.mxu0 0.0
        %758 = vmatprep.subr.mxu0 0.0
        %759 = vmatpush1.msra.mxu0 0.0
        %760 = vmatprep.subr.mxu0 0.0
        %761 = vmatpush1.msra.mxu0 0.0
        %762 = vmatprep.subr.mxu0 0.0
        %763 = vmatpush1.msra.mxu0 0.0
        %764 = vmatprep.subr.mxu0 0.0
        %765 = vmatpush1.msra.mxu0 0.0
        %766 = vmatprep.subr.mxu0 0.0
        %767 = vmatpush1.msra.mxu0 0.0
        %768 = vmatprep.subr.mxu0 0.0
        %769 = vmatpush1.msra.mxu0 0.0
        %770 = vmatprep.subr.mxu0 0.0
        %771 = vmatpush1.msra.mxu0 0.0
        %772 = vmatprep.subr.mxu0 0.0
        %773 = vmatpush1.msra.mxu0 0.0
        %774 = vmatprep.subr.mxu0 0.0
        %775 = vmatpush1.msra.mxu0 0.0
        %776 = vmatprep.subr.mxu0 0.0
        %777 = vmatpush1.msra.mxu0 0.0
        %778 = vmatprep.subr.mxu0 0.0
        %779 = vmatpush1.msra.mxu0 0.0
        %780 = vmatprep.subr.mxu0 0.0
        %781 = vmatpush1.msra.mxu0 0.0
        %782 = vmatprep.subr.mxu0 0.0
        %783 = vmatpush1.msra.mxu0 0.0
        %784 = vmatprep.subr.mxu0 0.0
        %785 = vmatpush1.msra.mxu0 0.0
        %786 = vmatprep.subr.mxu0 0.0
        %787 = vmatpush1.msra.mxu0 0.0
        %788 = vmatprep.mubr.f32.mxu0 0.0
        %789 = vmatmul.mubr.f32.gmra.mrb[0].mxu0 %v708
        %v790 = vpop.f32.mrb[0].mxu0
        %v791 = vadd.f32 0.0, %v790
        %v792 = vpop.f32.mrb[0].mxu0
        %793 = vmatprep.mubr.f32.mxu0 0.0
        %794 = vmatmul.mubr.f32.gmra.mrb[0].mxu0 %v709
        %v795 = vpop.f32.mrb[0].mxu0
        %v796 = vadd.f32 0.0, %v795
        %v797 = vpop.f32.mrb[0].mxu0
        %798 = vmatprep.mubr.f32.mxu0 0.0
        %799 = vmatmul.mubr.f32.gmra.mrb[0].mxu0 %v710
        %v800 = vpop.f32.mrb[0].mxu0
        %v801 = vadd.f32 0.0, %v800
        %v802 = vpop.f32.mrb[0].mxu0
        %803 = vmatprep.mubr.f32.mxu0 0.0
        %804 = vmatmul.mubr.f32.gmra.mrb[0].mxu0 %v711
        %v805 = vpop.f32.mrb[0].mxu0
        %v806 = vadd.f32 0.0, %v805
        %v807 = vpop.f32.mrb[0].mxu0
        %808 = vmatprep.mubr.f32.mxu0 0.0
        %809 = vmatmul.mubr.f32.gmra.mrb[0].mxu0 %v712
        %v810 = vpop.f32.mrb[0].mxu0
        %v811 = vadd.f32 0.0, %v810
        %v812 = vpop.f32.mrb[0].mxu0
        %813 = vmatprep.mubr.f32.mxu0 0.0
        %814 = vmatmul.mubr.f32.gmra.mrb[0].mxu0 %v713
        %v815 = vpop.f32.mrb[0].mxu0
        %v816 = vadd.f32 0.0, %v815
        %v817 = vpop.f32.mrb[0].mxu0
        %818 = vmatprep.mubr.f32.mxu0 0.0
        %819 = vmatmul.mubr.f32.gmra.mrb[0].mxu0 %v714
        %v820 = vpop.f32.mrb[0].mxu0
        %v821 = vadd.f32 0.0, %v820
        %v822 = vpop.f32.mrb[0].mxu0
        %823 = vmatprep.mubr.f32.mxu0 0.0
        %824 = vmatmul.mubr.f32.gmra.mrb[0].mxu0 %v715
        %v825 = vpop.f32.mrb[0].mxu0
        %v826 = vadd.f32 0.0, %v825
        %v827 = vpop.f32.mrb[0].mxu0
        %828 = vmatprep.mubr.f32.mxu0 0.0
        %829 = vmatmul.mubr.f32.gmra.mrb[0].mxu0 %v716
        %v830 = vpop.f32.mrb[0].mxu0
        %v831 = vadd.f32 0.0, %v830
        %v832 = vpop.f32.mrb[0].mxu0
        %833 = vmatprep.mubr.f32.mxu0 0.0
        %834 = vmatmul.mubr.f32.gmra.mrb[0].mxu0 %v717
        %v835 = vpop.f32.mrb[0].mxu0
        %v836 = vadd.f32 0.0, %v835
        %v837 = vpop.f32.mrb[0].mxu0
        %838 = vmatprep.mubr.f32.mxu0 0.0
        %839 = vmatmul.mubr.f32.gmra.mrb[0].mxu0 %v718
        %v840 = vpop.f32.mrb[0].mxu0
        %v841 = vadd.f32 0.0, %v840
        %v842 = vpop.f32.mrb[0].mxu0
        %843 = vmatprep.mubr.f32.mxu0 0.0
        %844 = vmatmul.mubr.f32.gmra.mrb[0].mxu0 %v719
        %v845 = vpop.f32.mrb[0].mxu0
        %v846 = vadd.f32 0.0, %v845
        %v847 = vpop.f32.mrb[0].mxu0
        %848 = vmatprep.mubr.f32.mxu0 0.0
        %849 = vmatmul.mubr.f32.gmra.mrb[0].mxu0 %v720
        %v850 = vpop.f32.mrb[0].mxu0
        %v851 = vadd.f32 0.0, %v850
        %v852 = vpop.f32.mrb[0].mxu0
        %853 = vmatprep.mubr.f32.mxu0 0.0
        %854 = vmatmul.mubr.f32.gmra.mrb[0].mxu0 %v721
        %v855 = vpop.f32.mrb[0].mxu0
        %v856 = vadd.f32 0.0, %v855
        %v857 = vpop.f32.mrb[0].mxu0
        %858 = vmatprep.mubr.f32.mxu0 0.0
        %859 = vmatmul.mubr.f32.gmra.mrb[0].mxu0 %v722
        %v860 = vpop.f32.mrb[0].mxu0
        %v861 = vadd.f32 0.0, %v860
        %v862 = vpop.f32.mrb[0].mxu0
        %863 = vmatprep.mubr.f32.mxu0 0.0
        %864 = vmatmul.mubr.f32.gmra.mrb[0].mxu0 %v723
        %v865 = vpop.f32.mrb[0].mxu0
        %v866 = vadd.f32 0.0, %v865
        %v867 = vpop.f32.mrb[0].mxu0
        %868 = vdwg.mxu0
        %869 = vst [vmem:[%s238] sm:$0xff] %v791
        %870 = vst [vmem:[%s238 + $0x8] sm:$0xff] %v796
        %871 = vst [vmem:[%s238 + $0x10] sm:$0xff] %v801
        %872 = vst [vmem:[%s238 + $0x18] sm:$0xff] %v806
        %873 = vst [vmem:[%s238 + $0x20] sm:$0xff] %v811
        %874 = vst [vmem:[%s238 + $0x28] sm:$0xff] %v816
        %875 = vst [vmem:[%s238 + $0x30] sm:$0xff] %v821
        %876 = vst [vmem:[%s238 + $0x38] sm:$0xff] %v826
        %877 = vst [vmem:[%s238 + $0x40] sm:$0xff] %v831
        %878 = vst [vmem:[%s238 + $0x48] sm:$0xff] %v836
        %879 = vst [vmem:[%s238 + $0x50] sm:$0xff] %v841
        %880 = vst [vmem:[%s238 + $0x58] sm:$0xff] %v846
        %881 = vst [vmem:[%s238 + $0x60] sm:$0xff] %v851
        %882 = vst [vmem:[%s238 + $0x68] sm:$0xff] %v856
        %883 = vst [vmem:[%s238 + $0x70] sm:$0xff] %v861
        %884 = vst [vmem:[%s238 + $0x78] sm:$0xff] %v866
        %v885 = vsub.f32 %v791, %v295
        %v886 = vsub.f32 %v796, %v296
        %v887 = vsub.f32 %v801, %v297
        %v888 = vsub.f32 %v806, %v298
        %v889 = vsub.f32 %v811, %v299
        %v890 = vsub.f32 %v816, %v300
        %v891 = vsub.f32 %v821, %v301
        %v892 = vsub.f32 %v826, %v302
        %v893 = vsub.f32 %v831, %v303
        %v894 = vsub.f32 %v836, %v304
        %v895 = vsub.f32 %v841, %v305
        %v896 = vsub.f32 %v846, %v306
        %v897 = vsub.f32 %v851, %v307
        %v898 = vsub.f32 %v856, %v308
        %v899 = vsub.f32 %v861, %v309
        %v900 = vsub.f32 %v866, %v310
        %v901 = vmul.f32 %v885, %v885
        %v902 = vmul.f32 %v886, %v886
        %v903 = vmul.f32 %v887, %v887
        %v904 = vmul.f32 %v888, %v888
        %v905 = vmul.f32 %v889, %v889
        %v906 = vmul.f32 %v890, %v890
        %v907 = vmul.f32 %v891, %v891
        %v908 = vmul.f32 %v892, %v892
        %v909 = vmul.f32 %v893, %v893
        %v910 = vmul.f32 %v894, %v894
        %v911 = vmul.f32 %v895, %v895
        %v912 = vmul.f32 %v896, %v896
        %v913 = vmul.f32 %v897, %v897
        %v914 = vmul.f32 %v898, %v898
        %v915 = vmul.f32 %v899, %v899
        %v916 = vmul.f32 %v900, %v900
        %v917 = vadd.f32 %v901, %v902
        %v918 = vadd.f32 %v917, %v903
        %v919 = vadd.f32 %v918, %v904
        %v920 = vadd.f32 %v919, %v905
        %v921 = vadd.f32 %v920, %v906
        %v922 = vadd.f32 %v921, %v907
        %v923 = vadd.f32 %v922, %v908
        %v924 = vadd.f32 %v923, %v909
        %v925 = vadd.f32 %v924, %v910
        %v926 = vadd.f32 %v925, %v911
        %v927 = vadd.f32 %v926, %v912
        %v928 = vadd.f32 %v927, %v913
        %v929 = vadd.f32 %v928, %v914
        %v930 = vadd.f32 %v929, %v915
        %v931 = vadd.f32 %v930, %v916
        %932 = vadd.xlane.f32.xlu0 %v931
        %v933 = vpop.xlane.xlu0 %932
        %v934 = vrot.slane %v933, 4
        %v935 = vadd.f32 %v933, %v934
        %v936 = vrot.slane %v935, 2
        %v937 = vadd.f32 %v935, %v936
        %v938 = vrot.slane %v937, 1
        %v939 = vadd.f32 %v937, %v938
        %s940 = vtos %v939
        %v941 = vstv %s940
        %v942 = vadd.f32 %v941, 0.0
        %943 = vmatprep.subr.mxu0 0.0
        %944 = vmatpush1.xpose.msra.mxu0 %v676
        %945 = vmatprep.subr.mxu0 0.0
        %946 = vmatpush1.xpose.msra.mxu0 %v677
        %947 = vmatprep.subr.mxu0 0.0
        %948 = vmatpush1.xpose.msra.mxu0 %v678
        %949 = vmatprep.subr.mxu0 0.0
        %950 = vmatpush1.xpose.msra.mxu0 %v679
        %951 = vmatprep.subr.mxu0 0.0
        %952 = vmatpush1.xpose.msra.mxu0 %v680
        %953 = vmatprep.subr.mxu0 0.0
        %954 = vmatpush1.xpose.msra.mxu0 %v681
        %955 = vmatprep.subr.mxu0 0.0
        %956 = vmatpush1.xpose.msra.mxu0 %v682
        %957 = vmatprep.subr.mxu0 0.0
        %958 = vmatpush1.xpose.msra.mxu0 %v683
        %959 = vmatprep.subr.mxu0 0.0
        %960 = vmatpush1.xpose.msra.mxu0 %v684
        %961 = vmatprep.subr.mxu0 0.0
        %962 = vmatpush1.xpose.msra.mxu0 %v685
        %963 = vmatprep.subr.mxu0 0.0
        %964 = vmatpush1.xpose.msra.mxu0 %v686
        %965 = vmatprep.subr.mxu0 0.0
        %966 = vmatpush1.xpose.msra.mxu0 %v687
        %967 = vmatprep.subr.mxu0 0.0
        %968 = vmatpush1.xpose.msra.mxu0 %v688
        %969 = vmatprep.subr.mxu0 0.0
        %970 = vmatpush1.xpose.msra.mxu0 %v689
        %971 = vmatprep.subr.mxu0 0.0
        %972 = vmatpush1.xpose.msra.mxu0 %v690
        %973 = vmatprep.subr.mxu0 0.0
        %974 = vmatpush1.xpose.msra.mxu0 %v691
        %975 = vmatprep.subr.mxu0 0.0
        %976 = vmatpush1.xpose.msra.mxu0 0.0
        %977 = vmatprep.subr.mxu0 0.0
        %978 = vmatpush1.xpose.msra.mxu0 0.0
        %979 = vmatprep.subr.mxu0 0.0
        %980 = vmatpush1.xpose.msra.mxu0 0.0
        %981 = vmatprep.subr.mxu0 0.0
        %982 = vmatpush1.xpose.msra.mxu0 0.0
        %983 = vmatprep.subr.mxu0 0.0
        %984 = vmatpush1.xpose.msra.mxu0 0.0
        %985 = vmatprep.subr.mxu0 0.0
        %986 = vmatpush1.xpose.msra.mxu0 0.0
        %987 = vmatprep.subr.mxu0 0.0
        %988 = vmatpush1.xpose.msra.mxu0 0.0
        %989 = vmatprep.subr.mxu0 0.0
        %990 = vmatpush1.xpose.msra.mxu0 0.0
        %991 = vmatprep.subr.mxu0 0.0
        %992 = vmatpush1.xpose.msra.mxu0 0.0
        %993 = vmatprep.subr.mxu0 0.0
        %994 = vmatpush1.xpose.msra.mxu0 0.0
        %995 = vmatprep.subr.mxu0 0.0
        %996 = vmatpush1.xpose.msra.mxu0 0.0
        %997 = vmatprep.subr.mxu0 0.0
        %998 = vmatpush1.xpose.msra.mxu0 0.0
        %999 = vmatprep.subr.mxu0 0.0
        %1000 = vmatpush1.xpose.msra.mxu0 0.0
        %1001 = vmatprep.subr.mxu0 0.0
        %1002 = vmatpush1.xpose.msra.mxu0 0.0
        %1003 = vmatprep.subr.mxu0 0.0
        %1004 = vmatpush1.xpose.msra.mxu0 0.0
        %1005 = vmatprep.subr.mxu0 0.0
        %1006 = vmatpush1.xpose.msra.mxu0 0.0
        %1007 = vmatprep.mubr.f32.mxu0 0.0
        %1008 = vmatmul.mubr.f32.gmra.mrb[0].mxu0 1.0
        %v1009 = vpop.f32.mrb[0].mxu0
        %v1010 = vadd.f32 0.0, %v1009
        %v1011 = vpop.f32.mrb[0].mxu0
        %1012 = vdwg.mxu0
        %1013 = vst [vmem:[%s245] sm:$0x1] %v1010
        %1014 = vst [vmem:[%s245 + $0x1] sm:$0x1] %v942
        %s1015 = sand.u32 %s117, 1
        %s1016 = scalar_lea.sflag [#allocation4], %s1015
        %s1017 = sand.u32 %s117, 1
        %s1018 = smul.addr %s1017, 128
        %s1019 = scalar_lea.vmem [#allocation5], %s1018
        %s1020 = sand.u32 %s145, 1
        %s1021 = scalar_lea.sflag [#allocation7], %s1020
        %s1022 = sand.u32 %s145, 1
        %s1023 = smul.addr %s1022, 2
        %s1024 = scalar_lea.vmem [#allocation6], %s1023
        // Predicated region
        $region37: #{tpu_custom_call.1} parent=31 // pred_check
          %p1025 = pneg %p127
        $region38: #{tpu_custom_call.1} parent=31 // pred_check_branch
          %1027 = sbr.rel (%p1025) target = $region40
        $region39: #{tpu_custom_call.1} parent=31 // pred_region
          %s1029 = ssub.s32 2048, 2048
          %1030 = vsyncadd %s1016, %s1029
          %s1031 = smul.addr %s29, 32
          %s1032 = sadd.s32 %s30, %s1031
          %s1033 = smul.addr %s1032, 128
          %s1034 = scalar_lea.hbm %s3, %s1033
          %s1035 = sshll.u32 %s1019, 4
          %s1036 = int_to_ptr.vmem [resolvable:$true] %s1035
          %1041 = dma.vmem_to_hbm [thread:$0]  %s1036, 2048, %s1034, %s1016, 128, 256, 8
        $region40: #{tpu_custom_call.1} parent=31 // pred_fallthru
          _
        // Predicated region
        $region41: #{tpu_custom_call.1} parent=31 // pred_check
          %p1042 = pneg %p155
        $region42: #{tpu_custom_call.1} parent=31 // pred_check_branch
          %1044 = sbr.rel (%p1042) target = $region44
        $region43: #{tpu_custom_call.1} parent=31 // pred_region
          %s1046 = ssub.s32 32, 32
          %1047 = vsyncadd %s1021, %s1046
          %s1048 = smul.addr %s29, 2
          %s1049 = sadd.s32 %s30, %s1048
          %s1050 = smul.addr %s1049, 32
          %s1051 = scalar_lea.hbm %s4, %s1050
          %s1053 = sshll.u32 %s1024, 4
          %s1054 = int_to_ptr.vmem [resolvable:$true] %s1053
          %1056 = dma.vmem_to_hbm [thread:$0]  %s1054, 32, %s1051, %s1021
        $region44: #{tpu_custom_call.1} parent=31 // pred_fallthru
          _
      $region32: #{tpu_custom_call.1} parent=5 // pred_fallthru
        _
      %p1057 = scmp.le.s32.totalorder 2, %s20
      // Predicated region
      $region45: #{tpu_custom_call.1} parent=5 // pred_check
        %p1058 = pneg %p1057
      $region46: #{tpu_custom_call.1} parent=5 // pred_check_branch
        %1060 = sbr.rel (%p1058) target = $region48
      $region47: #{tpu_custom_call.1} parent=5 // pred_region
        %s1061 = ssub.s32 %s20, 2
        // Predicated region
        $region49: #{tpu_custom_call.1} parent=47 // pred_check
          %p1062 = pneg %p133
        $region50: #{tpu_custom_call.1} parent=47 // pred_check_branch
          %1064 = sbr.rel (%p1062) target = $region52
        $region51: #{tpu_custom_call.1} parent=47 // pred_region
          %s1065 = sand.u32 %s118, 1
          %s1066 = scalar_lea.sflag [#allocation4], %s1065
          %s1067 = sand.u32 %s118, 1
          %s1068 = smul.addr %s1067, 128
          %s1069 = scalar_lea.vmem [#allocation5], %s1068
          %1070 = dma.done %s1066, 2048
        $region52: #{tpu_custom_call.1} parent=47 // pred_fallthru
          _
        // Predicated region
        $region53: #{tpu_custom_call.1} parent=47 // pred_check
          %p1071 = pneg %p161
        $region54: #{tpu_custom_call.1} parent=47 // pred_check_branch
          %1073 = sbr.rel (%p1071) target = $region56
        $region55: #{tpu_custom_call.1} parent=47 // pred_region
          %s1074 = sand.u32 %s146, 1
          %s1075 = scalar_lea.sflag [#allocation7], %s1074
          %s1076 = sand.u32 %s146, 1
          %s1077 = smul.addr %s1076, 2
          %s1078 = scalar_lea.vmem [#allocation6], %s1077
          %1079 = dma.done %s1075, 32
        $region56: #{tpu_custom_call.1} parent=47 // pred_fallthru
          _
      $region48: #{tpu_custom_call.1} parent=5 // pred_fallthru
        _
    $region6: #{tpu_custom_call.1} parent=1 // loop_footer
      %s24 = sadd.s32 1, %s20
    $region7: #{tpu_custom_call.1} parent=1 // loop_footer_branch
      %19 = sbr.rel target = $region3
    $region8: #{tpu_custom_call.1} parent=1 // loop_exit
      _
    %1080 = vsyncpa [#allocation3], 1
    %s1081 = scalar_lea.sflag [#allocation3], 1
    %1082 = vsyncpa %s1081, 1
    %1083 = vsyncpa [#allocation4], 1
    %s1084 = scalar_lea.sflag [#allocation4], 1
    %1085 = vsyncpa %s1084, 1
    %1086 = vsyncpa [#allocation7], 1
    %s1087 = scalar_lea.sflag [#allocation7], 1
    %1088 = vsyncpa %s1087, 1

</llo_original>
